<compile_context>
chip_gen: v7x
topology: tpu7x:2x2x1
jax: 0.10.0
libtpu: 0.0.40
codegen_flags: <defaults>
</compile_context>

<pallas_src>
import functools

import jax
import jax.numpy as jnp
from jax import lax
from jax.experimental import pallas as pl
from jax.experimental.pallas import tpu as pltpu


def _round_up(n, m):
    return ((n + m - 1) // m) * m


def _linear_dropout_kernel(x_ref, w_ref, b_ref, bits_ref, o_ref, *, thr, scale):
    # Linear: y = x @ W^T + b. Weight stays in PyTorch [out, inp] layout; the MXU
    # handles the transposed contraction natively (contract x dim 1 with w dim 1).
    y = lax.dot_general(
        x_ref[...], w_ref[...],
        dimension_numbers=(((1,), (1,)), ((), ())),
        preferred_element_type=jnp.float32)
    y = y + b_ref[...]                                    # b_ref is (1, out)

    # Inverted dropout: keep iff bits >= thr (P(keep) = 1 - p), one fused select.
    keep = bits_ref[...] >= jnp.uint32(thr)
    o_ref[...] = jnp.where(keep, y * jnp.float32(scale),
                           jnp.float32(0.0)).astype(o_ref.dtype)


def linear_dropout(x, weight, bias, key, *, p=0.5, training=True, block_rows=512):
    """x: [B, inp] f32, weight: [out, inp] f32 (PyTorch layout), bias: [out] f32.

    key: jax PRNG key used to draw the dropout bits (training mode only).
    """
    B, inp = x.shape
    out = weight.shape[0]

    p_eff = float(p) if training else 0.0
    if p_eff >= 1.0:
        raise ValueError("p must be < 1 (inverted-dropout scale 1/(1-p)).")
    thr = int(round(p_eff * (1 << 32)))      # uint32 threshold; 0 => keep everything
    scale = 1.0 / (1.0 - p_eff)

    # Batch tiling: TB rows per grid step (multiple of 8 for sublane alignment).
    tb = min(block_rows, _round_up(B, 8))
    b_pad = _round_up(B, tb)
    x_p = jnp.pad(x, ((0, b_pad - B), (0, 0))) if b_pad != B else x
    bias2d = bias.reshape(1, out)
    # Distinct bits per element => distinct mask per tile (no correlated dropout).
    bits = jax.random.bits(key, (b_pad, out), dtype=jnp.uint32)

    kernel = functools.partial(_linear_dropout_kernel, thr=thr, scale=scale)

    y = pl.pallas_call(
        kernel,
        out_shape=jax.ShapeDtypeStruct((b_pad, out), x.dtype),
        grid=(b_pad // tb,),
        in_specs=[
            pl.BlockSpec((tb, inp), lambda i: (i, 0)),     # x batch tile
            pl.BlockSpec((out, inp), lambda i: (0, 0)),    # weight (resident)
            pl.BlockSpec((1, out), lambda i: (0, 0)),      # bias   (resident)
            pl.BlockSpec((tb, out), lambda i: (i, 0)),     # dropout bits tile
        ],
        out_specs=pl.BlockSpec((tb, out), lambda i: (i, 0)),
        compiler_params=pltpu.CompilerParams(
            dimension_semantics=("parallel",)),            # megacore on v7x
    )(x_p, weight, bias2d, bits)

    return y[:B] if b_pad != B else y


if __name__ == "__main__":
    INP, OUT, P = 10, 16, 0.5
    B = 8

    root = jax.random.PRNGKey(0)
    kx, kw, kb, kdrop = jax.random.split(root, 4)

    # Deterministic parameter init (mirrors nn.Linear's uniform range).
    bound = 1.0 / (INP ** 0.5)
    weight = jax.random.uniform(kw, (OUT, INP), jnp.float32, -bound, bound)
    bias = jax.random.uniform(kb, (OUT,), jnp.float32, -bound, bound)
    x = jax.random.normal(kx, (B, INP), jnp.float32)

    # Training-mode forward (Linear + inverted dropout, p=0.5).
    y = jax.block_until_ready(linear_dropout(x, weight, bias, kdrop, p=P, training=True))
    assert y.shape == (B, OUT)

    # Deterministic reference: same bits, same threshold.
    ref_lin = jnp.dot(x, weight.T, precision=lax.Precision.HIGHEST) + bias
    bits = jax.random.bits(kdrop, (B, OUT), dtype=jnp.uint32)
    thr = jnp.uint32(int(round(P * (1 << 32))))
    keep = bits >= thr
    expected = jnp.where(keep, ref_lin / (1.0 - P), 0.0)
    assert bool(jnp.all((y == 0.0) == ~keep)), "dropout mask mismatch"
    assert jnp.allclose(y, expected, rtol=1e-2, atol=1e-2), "training-mode mismatch"

    # Eval-mode forward must be the plain linear output (dropout disabled).
    y_eval = jax.block_until_ready(
        linear_dropout(x, weight, bias, kdrop, p=P, training=False))
    assert jnp.allclose(y_eval, ref_lin, rtol=1e-2, atol=1e-2), "eval-mode mismatch"

    print("KERNEL_OK")
</pallas_src>

<mosaic_0001>
module attributes {stable_mosaic.version = 11 : i64} {
  func.func @_linear_dropout_kernel(%arg0: i32, %arg1: memref<8x10xf32, #tpu.memory_space<vmem>>, %arg2: memref<16x10xf32, #tpu.memory_space<vmem>>, %arg3: memref<1x16xf32, #tpu.memory_space<vmem>>, %arg4: memref<8x16xi32, #tpu.memory_space<vmem>>, %arg5: memref<8x16xf32, #tpu.memory_space<vmem>>) attributes {dimension_semantics = [#tpu.dimension_semantics<parallel>], iteration_bounds = array<i64: 1>, scalar_prefetch = 0 : i64, scratch_operands = 0 : i64, tpu.core_type = #tpu.core_type<tc>, window_params = [{transform_indices = @transform_0, window_bounds = array<i64: 8, 10>}, {pipeline_mode = #tpu.pipeline_mode<synchronous>, transform_indices = @transform_1, window_bounds = array<i64: 16, 10>}, {pipeline_mode = #tpu.pipeline_mode<synchronous>, transform_indices = @transform_2, window_bounds = array<i64: 1, 16>}, {transform_indices = @transform_3, window_bounds = array<i64: 8, 16>}, {transform_indices = @transform_4, window_bounds = array<i64: 8, 16>}]} {
    %c0 = arith.constant 0 : index
    %c0_0 = arith.constant 0 : index
    %0 = vector.load %arg1[%c0, %c0_0] : memref<8x10xf32, #tpu.memory_space<vmem>>, vector<8x10xf32>
    %c0_1 = arith.constant 0 : index
    %c0_2 = arith.constant 0 : index
    %1 = vector.load %arg2[%c0_1, %c0_2] : memref<16x10xf32, #tpu.memory_space<vmem>>, vector<16x10xf32>
    %cst = arith.constant dense<0.000000e+00> : vector<8x16xf32>
    %2 = tpu.matmul %0, %1, %cst {dimension_numbers = #tpu.dot_dimension_numbers<[1], [1], [0], [0], [0, 0, 1, 0], [], []>} : vector<8x10xf32>, vector<16x10xf32>, vector<8x16xf32> -> vector<8x16xf32>
    %c0_3 = arith.constant 0 : index
    %c0_4 = arith.constant 0 : index
    %3 = vector.load %arg3[%c0_3, %c0_4] : memref<1x16xf32, #tpu.memory_space<vmem>>, vector<1x16xf32>
    %4 = vector.broadcast %3 : vector<1x16xf32> to vector<8x16xf32>
    %5 = arith.addf %2, %4 : vector<8x16xf32>
    %c0_5 = arith.constant 0 : index
    %c0_6 = arith.constant 0 : index
    %6 = vector.load %arg4[%c0_5, %c0_6] : memref<8x16xi32, #tpu.memory_space<vmem>>, vector<8x16xi32>
    %c-2147483648_i32 = arith.constant -2147483648 : i32
    %7 = vector.broadcast %c-2147483648_i32 : i32 to vector<8x16xi32>
    %8 = arith.cmpi uge, %6, %7 : vector<8x16xi32>
    %cst_7 = arith.constant 2.000000e+00 : f32
    %9 = vector.broadcast %cst_7 : f32 to vector<8x16xf32>
    %10 = arith.mulf %5, %9 : vector<8x16xf32>
    %cst_8 = arith.constant 0.000000e+00 : f32
    %11 = vector.broadcast %cst_8 : f32 to vector<8x16xf32>
    %12 = arith.select %8, %10, %11 : vector<8x16xi1>, vector<8x16xf32>
    %c0_9 = arith.constant 0 : index
    %c0_10 = arith.constant 0 : index
    %13 = vector.load %arg5[%c0_9, %c0_10] : memref<8x16xf32, #tpu.memory_space<vmem>>, vector<8x16xf32>
    tpu.vector_store %arg5[%c0_9, %c0_10], %12 {strides = array<i32>} : memref<8x16xf32, #tpu.memory_space<vmem>>, vector<8x16xf32>,
    return
  }
  func.func @transform_0(%arg0: i32) -> (i32, i32) {
    %c0_i32 = arith.constant 0 : i32
    %c0_i32_0 = arith.constant 0 : i32
    return %arg0, %c0_i32 : i32, i32
  }
  func.func @transform_1(%arg0: i32) -> (i32, i32) {
    %c0_i32 = arith.constant 0 : i32
    %c0_i32_0 = arith.constant 0 : i32
    %c0_i32_1 = arith.constant 0 : i32
    return %c0_i32, %c0_i32_0 : i32, i32
  }
  func.func @transform_2(%arg0: i32) -> (i32, i32) {
    %c0_i32 = arith.constant 0 : i32
    %c0_i32_0 = arith.constant 0 : i32
    %c0_i32_1 = arith.constant 0 : i32
    return %c0_i32, %c0_i32_0 : i32, i32
  }
  func.func @transform_3(%arg0: i32) -> (i32, i32) {
    %c0_i32 = arith.constant 0 : i32
    %c0_i32_0 = arith.constant 0 : i32
    return %arg0, %c0_i32 : i32, i32
  }
  func.func @transform_4(%arg0: i32) -> (i32, i32) {
    %c0_i32 = arith.constant 0 : i32
    %c0_i32_0 = arith.constant 0 : i32
    return %arg0, %c0_i32 : i32, i32
  }
}

</mosaic_0001>

<llo_original>
// kernel: tpu_custom_call.1
$region0: #{tpu_custom_call.1}
  #allocation0 [shape = 'u32[]', space=smem, size = 0x4, offset = 0x4, fixed_abs, tag = 'smem constant byte address 0x4 - core index']
  #allocation1 [shape = 'u32[144,128]{1,0:T(1,128)}', space=vmem, size = 0x12000, scoped, tag = 'internal scratch']
  %s0 = inlined_call_operand.hbm [shape: f32[8,10], index: 0, kind: input, shape index: {}]
  %s1 = inlined_call_operand.hbm [shape: f32[16,10], index: 1, kind: input, shape index: {}]
  %s2 = inlined_call_operand.vmem [shape: f32[1,16], index: 2, kind: input, shape index: {}]
  %s3 = inlined_call_operand.vmem [shape: u32[8,16], index: 3, kind: input, shape index: {}]
  %s4 = inlined_call_operand.hbm [shape: f32[8,16], index: 4, kind: output, shape index: {}]
  %s5 = sld [smem:[#allocation0]]
  $region34: #{tpu_custom_call.1} parent=0
    _
  %s7 = ssub.s32 1, %s5
  %s8 = scalar_select 0, %s7, %s5
  $region1: #{tpu_custom_call.1} parent=0
    #allocation2 [shape = 'u8[4096]{0}', space=vmem, size = 0x1000, scoped, tag = 'input window, operand 0, single buffered']
    #allocation3 [shape = 's32[1]{0}', space=sflag, size = 0x4, scoped, tag = 'scoped memory for tpu_custom_call.1']
    #allocation4 [shape = 's32[1]{0}', space=sflag, size = 0x4, scoped, tag = 'scoped memory for tpu_custom_call.1']
    #allocation5 [shape = 'u8[8192]{0}', space=vmem, size = 0x2000, scoped, tag = 'input window, operand 1, single buffered']
    #allocation6 [shape = 's32[1]{0}', space=sflag, size = 0x4, scoped, tag = 'scoped memory for tpu_custom_call.1']
    #allocation7 [shape = 'u8[4096]{0}', space=vmem, size = 0x1000, scoped, tag = 'output window, operand 0, single buffered']
    %9 = vsyncpa [#allocation3], 0
    %10 = vsyncpa [#allocation6], 0
    %11 = vsyncpa [#allocation4], 0
    // Predicated region
    $region2: #{tpu_custom_call.1} parent=1 // pred_check
      _
    $region3: #{tpu_custom_call.1} parent=1 // pred_check_branch
      %13 = sbr.rel (0) target = $region5
    $region4: #{tpu_custom_call.1} parent=1 // pred_region
      %s15 = ssub.s32 128, 128
      %16 = vsyncadd [#allocation3], %s15
      %s18 = sshll.u32 [#allocation2], 4
      %s19 = int_to_ptr.vmem [resolvable:$true] %s18
      %21 = dma.hbm_to_vmem [thread:$0]  %s0, 128, %s19, [#allocation3]
    $region5: #{tpu_custom_call.1} parent=1 // pred_fallthru
      _
    // Predicated region
    $region6: #{tpu_custom_call.1} parent=1 // pred_check
      _
    $region7: #{tpu_custom_call.1} parent=1 // pred_check_branch
      %23 = sbr.rel (0) target = $region9
    $region8: #{tpu_custom_call.1} parent=1 // pred_region
      %s25 = ssub.s32 256, 256
      %26 = vsyncadd [#allocation6], %s25
      %s27 = sshll.u32 [#allocation5], 4
      %s28 = int_to_ptr.vmem [resolvable:$true] %s27
      %33 = dma.hbm_to_vmem [thread:$0]  %s1, 256, %s28, [#allocation6], 128, 128, 8
    $region9: #{tpu_custom_call.1} parent=1 // pred_fallthru
      _
    // Predicated region
    $region10: #{tpu_custom_call.1} parent=1 // pred_check
      _
    $region11: #{tpu_custom_call.1} parent=1 // pred_check_branch
      %35 = sbr.rel (0) target = $region13
    $region12: #{tpu_custom_call.1} parent=1 // pred_region
      _
    $region13: #{tpu_custom_call.1} parent=1 // pred_fallthru
      _
    // Predicated region
    $region14: #{tpu_custom_call.1} parent=1 // pred_check
      _
    $region15: #{tpu_custom_call.1} parent=1 // pred_check_branch
      %37 = sbr.rel (0) target = $region17
    $region16: #{tpu_custom_call.1} parent=1 // pred_region
      _
    $region17: #{tpu_custom_call.1} parent=1 // pred_fallthru
      _
    // Predicated region
    $region18: #{tpu_custom_call.1} parent=1 // pred_check
      _
    $region19: #{tpu_custom_call.1} parent=1 // pred_check_branch
      %39 = sbr.rel (0) target = $region21
    $region20: #{tpu_custom_call.1} parent=1 // pred_region
      %40 = dma.done [#allocation3], 128
    $region21: #{tpu_custom_call.1} parent=1 // pred_fallthru
      _
    // Predicated region
    $region22: #{tpu_custom_call.1} parent=1 // pred_check
      _
    $region23: #{tpu_custom_call.1} parent=1 // pred_check_branch
      %42 = sbr.rel (0) target = $region25
    $region24: #{tpu_custom_call.1} parent=1 // pred_region
      %43 = dma.done [#allocation6], 256
    $region25: #{tpu_custom_call.1} parent=1 // pred_fallthru
      _
    %v44 = vld [vmem:[#allocation2] sm:$0xff]
    %v45 = vld [vmem:[#allocation5] sm:$0xff]
    %v46 = vld [vmem:[#allocation5 + $0x8] sm:$0xff]
    %v47 = vld [vmem:[%s2] sm:$0x1]
    %v49 = vlaneseq
    %v50 = vshrl.u32 %v49, 7
    %v51 = vsub.s32 0, %v50
    %v52 = vrot.slane %v47, %v51
    %vm54 = vcmask 80896
    %v56 = vsel %vm54, %v44, 0
    %v59 = vsel %vm54, %v45, 0
    %v62 = vsel %vm54, %v46, 0
    %64 = vmatprep.subr.mxu0 0.0
    %65 = vmatpush1.xpose.msra.mxu0 %v59
    %66 = vmatprep.subr.mxu0 0.0
    %67 = vmatpush1.xpose.msra.mxu0 %v62
    %68 = vmatprep.subr.mxu0 0.0
    %69 = vmatpush1.xpose.msra.mxu0 0.0
    %70 = vmatprep.subr.mxu0 0.0
    %71 = vmatpush1.xpose.msra.mxu0 0.0
    %72 = vmatprep.subr.mxu0 0.0
    %73 = vmatpush1.xpose.msra.mxu0 0.0
    %74 = vmatprep.subr.mxu0 0.0
    %75 = vmatpush1.xpose.msra.mxu0 0.0
    %76 = vmatprep.subr.mxu0 0.0
    %77 = vmatpush1.xpose.msra.mxu0 0.0
    %78 = vmatprep.subr.mxu0 0.0
    %79 = vmatpush1.xpose.msra.mxu0 0.0
    %80 = vmatprep.subr.mxu0 0.0
    %81 = vmatpush1.xpose.msra.mxu0 0.0
    %82 = vmatprep.subr.mxu0 0.0
    %83 = vmatpush1.xpose.msra.mxu0 0.0
    %84 = vmatprep.subr.mxu0 0.0
    %85 = vmatpush1.xpose.msra.mxu0 0.0
    %86 = vmatprep.subr.mxu0 0.0
    %87 = vmatpush1.xpose.msra.mxu0 0.0
    %88 = vmatprep.subr.mxu0 0.0
    %89 = vmatpush1.xpose.msra.mxu0 0.0
    %90 = vmatprep.subr.mxu0 0.0
    %91 = vmatpush1.xpose.msra.mxu0 0.0
    %92 = vmatprep.subr.mxu0 0.0
    %93 = vmatpush1.xpose.msra.mxu0 0.0
    %94 = vmatprep.subr.mxu0 0.0
    %95 = vmatpush1.xpose.msra.mxu0 0.0
    %96 = vmatprep.subr.mxu0 0.0
    %97 = vmatpush1.xpose.msra.mxu0 0.0
    %98 = vmatprep.subr.mxu0 0.0
    %99 = vmatpush1.xpose.msra.mxu0 0.0
    %100 = vmatprep.subr.mxu0 0.0
    %101 = vmatpush1.xpose.msra.mxu0 0.0
    %102 = vmatprep.subr.mxu0 0.0
    %103 = vmatpush1.xpose.msra.mxu0 0.0
    %104 = vmatprep.subr.mxu0 0.0
    %105 = vmatpush1.xpose.msra.mxu0 0.0
    %106 = vmatprep.subr.mxu0 0.0
    %107 = vmatpush1.xpose.msra.mxu0 0.0
    %108 = vmatprep.subr.mxu0 0.0
    %109 = vmatpush1.xpose.msra.mxu0 0.0
    %110 = vmatprep.subr.mxu0 0.0
    %111 = vmatpush1.xpose.msra.mxu0 0.0
    %112 = vmatprep.subr.mxu0 0.0
    %113 = vmatpush1.xpose.msra.mxu0 0.0
    %114 = vmatprep.subr.mxu0 0.0
    %115 = vmatpush1.xpose.msra.mxu0 0.0
    %116 = vmatprep.subr.mxu0 0.0
    %117 = vmatpush1.xpose.msra.mxu0 0.0
    %118 = vmatprep.subr.mxu0 0.0
    %119 = vmatpush1.xpose.msra.mxu0 0.0
    %120 = vmatprep.subr.mxu0 0.0
    %121 = vmatpush1.xpose.msra.mxu0 0.0
    %122 = vmatprep.subr.mxu0 0.0
    %123 = vmatpush1.xpose.msra.mxu0 0.0
    %124 = vmatprep.subr.mxu0 0.0
    %125 = vmatpush1.xpose.msra.mxu0 0.0
    %126 = vmatprep.subr.mxu0 0.0
    %127 = vmatpush1.xpose.msra.mxu0 0.0
    %128 = vmatprep.mubr.f32.mxu0 0.0
    %129 = vmatmul.mubr.f32.gmra.mrb[0].mxu0 %v56
    %v130 = vpop.f32.mrb[0].mxu0
    %v131 = vadd.f32 %v52, %v130
    %v132 = vpop.f32.mrb[0].mxu0
    %133 = vdwg.mxu0
    %v134 = vld [vmem:[%s3] sm:$0xff]
    %vm135 = vcmp.ge.u32.totalorder %v134, 2147483648
    %v136 = vmul.f32 %v131, 2.0
    %v137 = vsel %vm135, %v136, 0.0
    %vm138 = vcmask 130048
    %139 = vst.msk [vmem:[#allocation7] sm:$0xff] %vm138, %v137
    // Predicated region
    $region26: #{tpu_custom_call.1} parent=1 // pred_check
      _
    $region27: #{tpu_custom_call.1} parent=1 // pred_check_branch
      %141 = sbr.rel (0) target = $region29
    $region28: #{tpu_custom_call.1} parent=1 // pred_region
      %s143 = ssub.s32 128, 128
      %144 = vsyncadd [#allocation4], %s143
      %s146 = sshll.u32 [#allocation7], 4
      %s147 = int_to_ptr.vmem [resolvable:$true] %s146
      %149 = dma.vmem_to_hbm [thread:$0]  %s147, 128, %s4, [#allocation4]
    $region29: #{tpu_custom_call.1} parent=1 // pred_fallthru
      _
    // Predicated region
    $region30: #{tpu_custom_call.1} parent=1 // pred_check
      _
    $region31: #{tpu_custom_call.1} parent=1 // pred_check_branch
      %151 = sbr.rel (0) target = $region33
    $region32: #{tpu_custom_call.1} parent=1 // pred_region
      %152 = dma.done [#allocation4], 128
    $region33: #{tpu_custom_call.1} parent=1 // pred_fallthru
      _
    %153 = vsyncpa [#allocation3], 1
    %154 = vsyncpa [#allocation6], 1
    %155 = vsyncpa [#allocation4], 1

</llo_original>
